<compile_context>
chip_gen: v6e
topology: v6e:2x2x1
jax: 0.10.0
libtpu: 0.0.40
codegen_flags: <defaults>
</compile_context>

<pallas_src>
import jax
import jax.numpy as jnp
from jax.experimental import pallas as pl
from jax.experimental.pallas import tpu as pltpu


def _basis_cat_graph_kernel(A_ref, feat_ref, d0_ref, d1_ref,
                            wfi_ref, wfj_ref, we_ref, b_ref, out_ref):
    """Blocks:
      A    [bb, N, N]   adjacency (diagonal masked in-kernel)
      feat [bb, N, F]   agent features
      d0   [bb, N, N]   diff component 0 (agent index j on lanes)
      d1   [bb, N, N]   diff component 1
      wfi  [F, O]       (N-1) * W_fi^T   (self term, scaling folded in)
      wfj  [F, O]       W_fj^T           (neighbour-feature term)
      we   [2, O]       W_e^T            (diff term)
      b    [1, O]       (N-1) * bias
      out  [bb, N, O]
    """
    bb, N, _ = A_ref.shape
    F = feat_ref.shape[-1]
    O = out_ref.shape[-1]
    f32 = jnp.float32

    # Mask the diagonal (j == i messages are excluded): near-free VPU select on data
    # already in VMEM, instead of a full HBM pass in the wrapper.
    r = jax.lax.broadcasted_iota(jnp.int32, (N, N), 0)
    c = jax.lax.broadcasted_iota(jnp.int32, (N, N), 1)
    A_m = jnp.where((r != c)[None, :, :], A_ref[...].astype(f32), 0.0)   # [bb, N, N]

    # Feature projections: two lane-dense [bb*N, F] @ [F, O] MXU matmuls against the
    # pre-split weights (no lane-axis concat, no badly-padded K = 2F+2 contraction).
    # TODO(synk): if N % 8 != 0 these reshapes relayout the block in VMEM; pad N to a
    # multiple of 8 upstream if that ever shows up in profiles.
    feat2 = feat_ref[...].reshape(bb * N, F)
    proj_i = jnp.dot(feat2, wfi_ref[...], preferred_element_type=f32)    # (N-1)*f_i @ W_fi
    proj_j = jnp.dot(feat2, wfj_ref[...], preferred_element_type=f32)    # f_j @ W_fj

    # Neighbour mix on the MXU with lane width O:  A_masked @ (feat @ W_fj).
    term_j = jax.lax.dot_general(
        A_m, proj_j.reshape(bb, N, O),
        (((2,), (1,)), ((0,), (0,))),
        preferred_element_type=f32)                                      # [bb, N, O]

    # Edge (diff) term on the VPU: N sits on lanes, so the masked multiply is dense
    # and the reduce is a single lane pass; the 2-wide weight is applied with two
    # broadcast MACs instead of a K=2 MXU matmul.
    p0 = jnp.sum(A_m * d0_ref[...].astype(f32), axis=-1, keepdims=True)  # [bb, N, 1]
    p1 = jnp.sum(A_m * d1_ref[...].astype(f32), axis=-1, keepdims=True)  # [bb, N, 1]
    we = we_ref[...].astype(f32)                                         # [2, O]
    term_e = p0 * we[0:1, :][None, :, :] + p1 * we[1:2, :][None, :, :]   # [bb, N, O]

    h = (proj_i.reshape(bb, N, O) + term_j + term_e
         + b_ref[...].astype(f32)[None, :, :])
    out_ref[...] = jnp.maximum(h, 0.0).astype(out_ref.dtype)


# ----------------------------- block-size selection -----------------------------

def _round_up(x, m):
    return -(-x // m) * m


def _tile_padded_bytes(shape, dtype):
    """VMEM bytes of one buffer: last two dims padded to the (sublane, 128) tile."""
    itemsize = jnp.dtype(dtype).itemsize
    sublane = 8 * max(1, 4 // itemsize)          # 8 (f32) / 16 (bf16)
    if len(shape) < 2:
        shape = (1,) * (2 - len(shape)) + tuple(shape)
    lead = 1
    for d in shape[:-2]:
        lead *= int(d)
    return (lead * _round_up(int(shape[-2]), sublane)
            * _round_up(int(shape[-1]), 128) * itemsize)


_VMEM_WORKSET_BUDGET = 16 << 20    # conservative: v7x has 64 MiB physical / 32 MiB scoped


def _block_vmem_bytes(bb, N, F, O, dtype):
    f32 = jnp.float32
    io = (3 * _tile_padded_bytes((bb, N, N), dtype)        # A, d0, d1
          + _tile_padded_bytes((bb, N, F), dtype)          # feat
          + _tile_padded_bytes((bb, N, O), f32))           # out
    interm = (3 * _tile_padded_bytes((bb, N, N), f32)      # A_m, masked diff products
              + _tile_padded_bytes((bb * N, F), dtype)     # feat reshape copy
              + 3 * _tile_padded_bytes((bb * N, O), f32)   # proj_i, proj_j (+ reshape)
              + 4 * _tile_padded_bytes((bb, N, O), f32))   # term_j, term_e, h, relu
    return 2 * io + interm                                  # 2x: double-buffered pipeline


def _pick_batch_block(B, N, F, O, dtype, target_rows=1024):
    """~target_rows rows per grid step, >= 2 grid steps when B >= 2 (v7x megacore),
    and a tile-padded working set under the VMEM budget."""
    bb = max(1, min(B, max(1, target_rows // max(N, 1))))
    if B >= 2:
        bb = min(bb, pl.cdiv(B, 2))
    while bb > 1 and _block_vmem_bytes(bb, N, F, O, dtype) > _VMEM_WORKSET_BUDGET:
        bb = pl.cdiv(bb, 2)
    return bb


# ------------------------------------ wrapper ------------------------------------

def basis_cat_graph_layer(diff_vecs, agent_features, A, W_t, bias, *,
                          compute_dtype=jnp.bfloat16, target_rows=1024):
    """W_t: torch-style shared Linear weight [O, 2F+2]; bias: [O].
    Returns (diff_vecs, relu(out)) with out: [B, N, O] float32."""
    B, N, F = agent_features.shape
    O = W_t.shape[0]
    f32 = jnp.float32
    cdt = jnp.dtype(compute_dtype)

    # Pre-split the shared Linear weight (columns: [f_i | f_j | diff]) and fold the
    # (N-1) message count into the self weight and the bias (tiny one-time arrays).
    Wt = W_t.astype(f32)
    w_fi = (jnp.float32(N - 1) * Wt[:, :F].T).astype(cdt)          # [F, O]
    w_fj = Wt[:, F:2 * F].T.astype(cdt)                            # [F, O]
    w_e = Wt[:, 2 * F:].T.astype(cdt)                              # [2, O]
    b_s = (jnp.float32(N - 1) * bias.astype(f32)).reshape(1, O)    # [1, O] (kept f32)

    feat = agent_features.astype(cdt)                              # [B, N, F]
    A_c = A.astype(cdt)                                            # [B, N, N]
    d0 = diff_vecs[..., 0].astype(cdt)                             # [B, N, N]  N on lanes
    d1 = diff_vecs[..., 1].astype(cdt)                             # [B, N, N]

    bb = _pick_batch_block(B, N, F, O, cdt, target_rows=target_rows)
    grid = (pl.cdiv(B, bb),)

    est = _block_vmem_bytes(bb, N, F, O, cdt) + 4 * _tile_padded_bytes((F, O), cdt)
    vmem_limit = int(min(48 << 20, max(24 << 20, est + est // 4)))

    cost = pl.CostEstimate(
        flops=(4 * B * N * F * O            # feature projections
               + 2 * B * N * N * O          # neighbour mix
               + 4 * B * N * N              # masked diff products + lane reduces
               + 6 * B * N * O),            # edge MACs, bias, relu
        transcendentals=0,
        bytes_accessed=(cdt.itemsize * (3 * B * N * N + B * N * F + 2 * F * O + 2 * O)
                        + 4 * (O + B * N * O)),
    )

    out = pl.pallas_call(
        _basis_cat_graph_kernel,
        out_shape=jax.ShapeDtypeStruct((B, N, O), f32),
        grid=grid,
        in_specs=[
            pl.BlockSpec((bb, N, N), lambda g: (g, 0, 0)),   # A (diag masked in-kernel)
            pl.BlockSpec((bb, N, F), lambda g: (g, 0, 0)),   # agent features
            pl.BlockSpec((bb, N, N), lambda g: (g, 0, 0)),   # diff component 0
            pl.BlockSpec((bb, N, N), lambda g: (g, 0, 0)),   # diff component 1
            pl.BlockSpec((F, O), lambda g: (0, 0)),          # (N-1) * W_fi^T  (resident)
            pl.BlockSpec((F, O), lambda g: (0, 0)),          # W_fj^T          (resident)
            pl.BlockSpec((2, O), lambda g: (0, 0)),          # W_e^T           (resident)
            pl.BlockSpec((1, O), lambda g: (0, 0)),          # (N-1) * bias    (resident)
        ],
        out_specs=pl.BlockSpec((bb, N, O), lambda g: (g, 0, 0)),
        compiler_params=pltpu.CompilerParams(
            dimension_semantics=("parallel",),
            vmem_limit_bytes=vmem_limit),
        cost_estimate=cost,
    )(A_c, feat, d0, d1, w_fi, w_fj, w_e, b_s)

    return diff_vecs, out


# ----------------------------- reference (self-check) -----------------------------

def reference_forward(diff_vecs, agent_features, A, W_t, bias):
    """Pure-JAX mirror of the PyTorch message-passing loop."""
    B, N, F = agent_features.shape
    outs = []
    for i in range(N):
        msgs = []
        for j in range(N):
            if i == j:
                continue
            m = A[:, i, j][:, None] * jnp.concatenate(
                [agent_features[:, j], diff_vecs[:, i, j]], axis=1)
            msgs.append(m[:, None, :])
        msgs = jnp.concatenate(msgs, axis=1)                         # [B, N-1, F+2]
        f_rep = jnp.broadcast_to(agent_features[:, i][:, None, :], (B, N - 1, F))
        cat = jnp.concatenate([f_rep, msgs], axis=2)                 # [B, N-1, 2F+2]
        h = cat @ W_t.T + bias                                       # [B, N-1, O]
        outs.append(jnp.sum(h, axis=1)[:, None, :])
    return jnp.maximum(jnp.concatenate(outs, axis=1), 0.0)


if __name__ == "__main__":
    B, N, F, O = 2, 4, 8, 16          # batch, agents, input_size, output_size

    key = jax.random.PRNGKey(0)
    k1, k2, k3, k4, k5 = jax.random.split(key, 5)

    diff_vecs = jax.random.normal(k1, (B, N, N, 2), dtype=jnp.float32)
    agent_features = jax.random.normal(k2, (B, N, F), dtype=jnp.float32)
    A = jax.random.bernoulli(k3, 0.6, (B, N, N)).astype(jnp.float32)

    # torch.nn.Linear-style init: U(-1/sqrt(fan_in), 1/sqrt(fan_in))
    fan_in = 2 * F + 2
    bound = 1.0 / (fan_in ** 0.5)
    W_t = jax.random.uniform(k4, (O, fan_in), minval=-bound, maxval=bound,
                             dtype=jnp.float32)
    bias = jax.random.uniform(k5, (O,), minval=-bound, maxval=bound,
                              dtype=jnp.float32)

    ref = reference_forward(diff_vecs, agent_features, A, W_t, bias)

    # Exact path (f32 inputs): tight check against the reference loop.
    dv_out, out_f32 = basis_cat_graph_layer(diff_vecs, agent_features, A, W_t, bias,
                                            compute_dtype=jnp.float32)
    out_f32 = jax.block_until_ready(out_f32)
    assert out_f32.shape == (B, N, O)
    assert jnp.allclose(out_f32, ref, atol=1e-4, rtol=1e-4), "f32 mismatch vs reference"
    assert jnp.array_equal(dv_out, diff_vecs)

    # Default path (bf16 inputs, f32 accumulation): halves input HBM bytes.
    _, out_bf16 = basis_cat_graph_layer(diff_vecs, agent_features, A, W_t, bias)
    out_bf16 = jax.block_until_ready(out_bf16)
    assert out_bf16.shape == (B, N, O)
    assert jnp.allclose(out_bf16, ref, atol=5e-2, rtol=5e-2), "bf16 mismatch vs reference"

    print("KERNEL_OK")
</pallas_src>

<mosaic_0001>
module attributes {stable_mosaic.version = 11 : i64} {
  func.func @_basis_cat_graph_kernel(%arg0: i32, %arg1: memref<1x4x4xf32, #tpu.memory_space<vmem>>, %arg2: memref<1x4x8xf32, #tpu.memory_space<vmem>>, %arg3: memref<1x4x4xf32, #tpu.memory_space<vmem>>, %arg4: memref<1x4x4xf32, #tpu.memory_space<vmem>>, %arg5: memref<8x16xf32, #tpu.memory_space<vmem>>, %arg6: memref<8x16xf32, #tpu.memory_space<vmem>>, %arg7: memref<2x16xf32, #tpu.memory_space<vmem>>, %arg8: memref<1x16xf32, #tpu.memory_space<vmem>>, %arg9: memref<1x4x16xf32, #tpu.memory_space<vmem>>) attributes {dimension_semantics = [#tpu.dimension_semantics<parallel>], iteration_bounds = array<i64: 2>, scalar_prefetch = 0 : i64, scratch_operands = 0 : i64, tpu.core_type = #tpu.core_type<tc>, window_params = [{transform_indices = @transform_0, window_bounds = array<i64: 1, 4, 4>}, {transform_indices = @transform_1, window_bounds = array<i64: 1, 4, 8>}, {transform_indices = @transform_2, window_bounds = array<i64: 1, 4, 4>}, {transform_indices = @transform_3, window_bounds = array<i64: 1, 4, 4>}, {pipeline_mode = #tpu.pipeline_mode<synchronous>, transform_indices = @transform_4, window_bounds = array<i64: 8, 16>}, {pipeline_mode = #tpu.pipeline_mode<synchronous>, transform_indices = @transform_5, window_bounds = array<i64: 8, 16>}, {pipeline_mode = #tpu.pipeline_mode<synchronous>, transform_indices = @transform_6, window_bounds = array<i64: 2, 16>}, {pipeline_mode = #tpu.pipeline_mode<synchronous>, transform_indices = @transform_7, window_bounds = array<i64: 1, 16>}, {transform_indices = @transform_8, window_bounds = array<i64: 1, 4, 16>}]} {
    %0 = tpu.iota {dimensions = array<i32: 0>} : vector<4x4xi32>
    %1 = tpu.iota {dimensions = array<i32: 1>} : vector<4x4xi32>
    %2 = arith.cmpi ne, %0, %1 : vector<4x4xi32>
    %3 = vector.shape_cast %2 : vector<4x4xi1> to vector<1x4x4xi1>
    %c0 = arith.constant 0 : index
    %c0_0 = arith.constant 0 : index
    %c0_1 = arith.constant 0 : index
    %4 = vector.load %arg1[%c0, %c0_0, %c0_1] : memref<1x4x4xf32, #tpu.memory_space<vmem>>, vector<1x4x4xf32>
    %cst = arith.constant 0.000000e+00 : f32
    %5 = vector.broadcast %cst : f32 to vector<1x4x4xf32>
    %6 = arith.select %3, %4, %5 : vector<1x4x4xi1>, vector<1x4x4xf32>
    %c0_2 = arith.constant 0 : index
    %c0_3 = arith.constant 0 : index
    %c0_4 = arith.constant 0 : index
    %7 = vector.load %arg2[%c0_2, %c0_3, %c0_4] : memref<1x4x8xf32, #tpu.memory_space<vmem>>, vector<1x4x8xf32>
    %8 = vector.shape_cast %7 : vector<1x4x8xf32> to vector<4x8xf32>
    %c0_5 = arith.constant 0 : index
    %c0_6 = arith.constant 0 : index
    %9 = vector.load %arg5[%c0_5, %c0_6] : memref<8x16xf32, #tpu.memory_space<vmem>>, vector<8x16xf32>
    %cst_7 = arith.constant dense<0.000000e+00> : vector<4x16xf32>
    %10 = tpu.matmul %8, %9, %cst_7 {dimension_numbers = #tpu.dot_dimension_numbers<[1], [0], [0], [1], [0, 0, 1, 1], [], []>} : vector<4x8xf32>, vector<8x16xf32>, vector<4x16xf32> -> vector<4x16xf32>
    %c0_8 = arith.constant 0 : index
    %c0_9 = arith.constant 0 : index
    %11 = vector.load %arg6[%c0_8, %c0_9] : memref<8x16xf32, #tpu.memory_space<vmem>>, vector<8x16xf32>
    %cst_10 = arith.constant dense<0.000000e+00> : vector<4x16xf32>
    %12 = tpu.matmul %8, %11, %cst_10 {dimension_numbers = #tpu.dot_dimension_numbers<[1], [0], [0], [1], [0, 0, 1, 1], [], []>} : vector<4x8xf32>, vector<8x16xf32>, vector<4x16xf32> -> vector<4x16xf32>
    %13 = vector.shape_cast %12 : vector<4x16xf32> to vector<1x4x16xf32>
    %cst_11 = arith.constant dense<0.000000e+00> : vector<1x4x16xf32>
    %14 = tpu.matmul %6, %13, %cst_11 {dimension_numbers = #tpu.dot_dimension_numbers<[2], [1], [1], [2], [0, 0, 0, 1, 1, 2], [0], [0]>} : vector<1x4x4xf32>, vector<1x4x16xf32>, vector<1x4x16xf32> -> vector<1x4x16xf32>
    %c0_12 = arith.constant 0 : index
    %c0_13 = arith.constant 0 : index
    %c0_14 = arith.constant 0 : index
    %15 = vector.load %arg3[%c0_12, %c0_13, %c0_14] : memref<1x4x4xf32, #tpu.memory_space<vmem>>, vector<1x4x4xf32>
    %16 = arith.mulf %6, %15 : vector<1x4x4xf32>
    %cst_15 = arith.constant dense<0.000000e+00> : vector<1x4xf32>
    %17 = vector.multi_reduction <add>, %16, %cst_15 [2] : vector<1x4x4xf32> to vector<1x4xf32>
    %18 = vector.shape_cast %17 : vector<1x4xf32> to vector<1x4x1xf32>
    %c0_16 = arith.constant 0 : index
    %c0_17 = arith.constant 0 : index
    %c0_18 = arith.constant 0 : index
    %19 = vector.load %arg4[%c0_16, %c0_17, %c0_18] : memref<1x4x4xf32, #tpu.memory_space<vmem>>, vector<1x4x4xf32>
    %20 = arith.mulf %6, %19 : vector<1x4x4xf32>
    %cst_19 = arith.constant dense<0.000000e+00> : vector<1x4xf32>
    %21 = vector.multi_reduction <add>, %20, %cst_19 [2] : vector<1x4x4xf32> to vector<1x4xf32>
    %22 = vector.shape_cast %21 : vector<1x4xf32> to vector<1x4x1xf32>
    %c0_20 = arith.constant 0 : index
    %c0_21 = arith.constant 0 : index
    %23 = vector.load %arg7[%c0_20, %c0_21] : memref<2x16xf32, #tpu.memory_space<vmem>>, vector<2x16xf32>
    %24 = vector.extract_strided_slice %23 {offsets = [0, 0], sizes = [1, 16], strides = [1, 1]} : vector<2x16xf32> to vector<1x16xf32>
    %25 = vector.shape_cast %24 : vector<1x16xf32> to vector<1x1x16xf32>
    %26 = vector.broadcast %18 : vector<1x4x1xf32> to vector<1x4x16xf32>
    %27 = vector.broadcast %25 : vector<1x1x16xf32> to vector<1x4x16xf32>
    %28 = arith.mulf %26, %27 : vector<1x4x16xf32>
    %29 = vector.extract_strided_slice %23 {offsets = [1, 0], sizes = [1, 16], strides = [1, 1]} : vector<2x16xf32> to vector<1x16xf32>
    %30 = vector.shape_cast %29 : vector<1x16xf32> to vector<1x1x16xf32>
    %31 = vector.broadcast %22 : vector<1x4x1xf32> to vector<1x4x16xf32>
    %32 = vector.broadcast %30 : vector<1x1x16xf32> to vector<1x4x16xf32>
    %33 = arith.mulf %31, %32 : vector<1x4x16xf32>
    %34 = arith.addf %28, %33 : vector<1x4x16xf32>
    %35 = vector.shape_cast %10 : vector<4x16xf32> to vector<1x4x16xf32>
    %36 = arith.addf %35, %14 : vector<1x4x16xf32>
    %37 = arith.addf %36, %34 : vector<1x4x16xf32>
    %c0_22 = arith.constant 0 : index
    %c0_23 = arith.constant 0 : index
    %38 = vector.load %arg8[%c0_22, %c0_23] : memref<1x16xf32, #tpu.memory_space<vmem>>, vector<1x16xf32>
    %39 = vector.shape_cast %38 : vector<1x16xf32> to vector<1x1x16xf32>
    %40 = vector.broadcast %39 : vector<1x1x16xf32> to vector<1x4x16xf32>
    %41 = arith.addf %37, %40 : vector<1x4x16xf32>
    %cst_24 = arith.constant 0.000000e+00 : f32
    %42 = vector.broadcast %cst_24 : f32 to vector<1x4x16xf32>
    %43 = arith.maximumf %41, %42 : vector<1x4x16xf32>
    %c0_25 = arith.constant 0 : index
    %c0_26 = arith.constant 0 : index
    %c0_27 = arith.constant 0 : index
    %44 = vector.load %arg9[%c0_25, %c0_26, %c0_27] : memref<1x4x16xf32, #tpu.memory_space<vmem>>, vector<1x4x16xf32>
    tpu.vector_store %arg9[%c0_25, %c0_26, %c0_27], %43 {strides = array<i32>} : memref<1x4x16xf32, #tpu.memory_space<vmem>>, vector<1x4x16xf32>,
    return
  }
  func.func @transform_0(%arg0: i32) -> (i32, i32, i32) {
    %c0_i32 = arith.constant 0 : i32
    %c0_i32_0 = arith.constant 0 : i32
    %c0_i32_1 = arith.constant 0 : i32
    return %arg0, %c0_i32, %c0_i32_0 : i32, i32, i32
  }
  func.func @transform_1(%arg0: i32) -> (i32, i32, i32) {
    %c0_i32 = arith.constant 0 : i32
    %c0_i32_0 = arith.constant 0 : i32
    %c0_i32_1 = arith.constant 0 : i32
    return %arg0, %c0_i32, %c0_i32_0 : i32, i32, i32
  }
  func.func @transform_2(%arg0: i32) -> (i32, i32, i32) {
    %c0_i32 = arith.constant 0 : i32
    %c0_i32_0 = arith.constant 0 : i32
    %c0_i32_1 = arith.constant 0 : i32
    return %arg0, %c0_i32, %c0_i32_0 : i32, i32, i32
  }
  func.func @transform_3(%arg0: i32) -> (i32, i32, i32) {
    %c0_i32 = arith.constant 0 : i32
    %c0_i32_0 = arith.constant 0 : i32
    %c0_i32_1 = arith.constant 0 : i32
    return %arg0, %c0_i32, %c0_i32_0 : i32, i32, i32
  }
  func.func @transform_4(%arg0: i32) -> (i32, i32) {
    %c0_i32 = arith.constant 0 : i32
    %c0_i32_0 = arith.constant 0 : i32
    %c0_i32_1 = arith.constant 0 : i32
    return %c0_i32, %c0_i32_0 : i32, i32
  }
  func.func @transform_5(%arg0: i32) -> (i32, i32) {
    %c0_i32 = arith.constant 0 : i32
    %c0_i32_0 = arith.constant 0 : i32
    %c0_i32_1 = arith.constant 0 : i32
    return %c0_i32, %c0_i32_0 : i32, i32
  }
  func.func @transform_6(%arg0: i32) -> (i32, i32) {
    %c0_i32 = arith.constant 0 : i32
    %c0_i32_0 = arith.constant 0 : i32
    %c0_i32_1 = arith.constant 0 : i32
    return %c0_i32, %c0_i32_0 : i32, i32
  }
  func.func @transform_7(%arg0: i32) -> (i32, i32) {
    %c0_i32 = arith.constant 0 : i32
    %c0_i32_0 = arith.constant 0 : i32
    %c0_i32_1 = arith.constant 0 : i32
    return %c0_i32, %c0_i32_0 : i32, i32
  }
  func.func @transform_8(%arg0: i32) -> (i32, i32, i32) {
    %c0_i32 = arith.constant 0 : i32
    %c0_i32_0 = arith.constant 0 : i32
    %c0_i32_1 = arith.constant 0 : i32
    return %arg0, %c0_i32, %c0_i32_0 : i32, i32, i32
  }
}

</mosaic_0001>

<llo_original>
// kernel: tpu_custom_call.1
$region0: #{tpu_custom_call.1}
  #allocation0 [shape = 'u32[]', space=smem, size = 0x4, offset = 0x4, fixed_abs, tag = 'smem constant byte address 0x4 - core index']
  #allocation1 [shape = 'u32[144,128]{1,0:T(1,128)}', space=vmem, size = 0x12000, scoped, tag = 'internal scratch']
  %s0 = inlined_call_operand.hbm [shape: f32[2,4,4], index: 0, kind: input, shape index: {}]
  %s1 = inlined_call_operand.hbm [shape: f32[2,4,8], index: 1, kind: input, shape index: {}]
  %s2 = inlined_call_operand.hbm [shape: f32[2,4,4], index: 2, kind: input, shape index: {}]
  %s3 = inlined_call_operand.hbm [shape: f32[2,4,4], index: 3, kind: input, shape index: {}]
  %s4 = inlined_call_operand.hbm [shape: f32[8,16], index: 4, kind: input, shape index: {}]
  %s5 = inlined_call_operand.vmem [shape: f32[8,16], index: 5, kind: input, shape index: {}]
  %s6 = inlined_call_operand.vmem [shape: f32[2,16], index: 6, kind: input, shape index: {}]
  %s7 = inlined_call_operand.vmem [shape: f32[1,16], index: 7, kind: input, shape index: {}]
  %s8 = inlined_call_operand.hbm [shape: f32[2,4,16], index: 8, kind: output, shape index: {}]
  %s9 = sld [smem:[#allocation0]]
  $region85: #{tpu_custom_call.1} parent=0
    _
  %s11 = ssub.s32 1, %s9
  %s12 = scalar_select 0, %s11, %s9
  $region1: #{tpu_custom_call.1} parent=0
    #allocation2 [shape = 'u8[4096]{0}', space=vmem, size = 0x1000, scoped, tag = 'input window, operand 0']
    #allocation3 [shape = 's32[2]{0}', space=sflag, size = 0x8, scoped, tag = 'scoped memory for tpu_custom_call.1']
    #allocation4 [shape = 's32[2]{0}', space=sflag, size = 0x8, scoped, tag = 'scoped memory for tpu_custom_call.1']
    #allocation5 [shape = 'u8[4096]{0}', space=vmem, size = 0x1000, scoped, tag = 'input window, operand 1']
    #allocation6 [shape = 's32[2]{0}', space=sflag, size = 0x8, scoped, tag = 'scoped memory for tpu_custom_call.1']
    #allocation7 [shape = 'u8[4096]{0}', space=vmem, size = 0x1000, scoped, tag = 'input window, operand 2']
    #allocation8 [shape = 'u8[4096]{0}', space=vmem, size = 0x1000, scoped, tag = 'input window, operand 3']
    #allocation9 [shape = 's32[2]{0}', space=sflag, size = 0x8, scoped, tag = 'scoped memory for tpu_custom_call.1']
    #allocation10 [shape = 'u8[4096]{0}', space=vmem, size = 0x1000, scoped, tag = 'input window, operand 4, single buffered']
    #allocation11 [shape = 'u8[4096]{0}', space=vmem, size = 0x1000, scoped, tag = 'output window, operand 0']
    %13 = vsyncpa [#allocation3], 0
    %s14 = scalar_lea.sflag [#allocation3], 1
    %15 = vsyncpa %s14, 0
    %16 = vsyncpa [#allocation6], 0
    %s17 = scalar_lea.sflag [#allocation6], 1
    %18 = vsyncpa %s17, 0
    %19 = vsyncpa [#allocation9], 0
    %s20 = scalar_lea.sflag [#allocation9], 1
    %21 = vsyncpa %s20, 0
    %22 = vsyncpa [#allocation4], 0
    %s23 = scalar_lea.sflag [#allocation4], 1
    %24 = vsyncpa %s23, 0
    loop: start=0, step=1, limit=4
    $region2: #{tpu_custom_call.1} parent=1 // loop_pre_header
      _
    $region3: #{tpu_custom_call.1} parent=1 // loop_header
      %s26 = sphi 0, %s30
      %p27 = scmp.ge.s32.totalorder %s26, 4
      %s36 = sphi 0, %s38
      %s39 = sphi 0, %s36
      %s40 = sphi 0, %s39
      %s56 = sphi 0, %s40
      %s62 = sphi 0, %s64
      %s65 = sphi 0, %s62
      %s66 = sphi 0, %s65
      %s82 = sphi 0, %s66
      %s88 = sphi 0, %s90
      %s91 = sphi 0, %s88
      %s92 = sphi 0, %s91
      %s108 = sphi 0, %s92
      %s114 = sphi 0, %s116
      %s117 = sphi 0, %s114
      %s118 = sphi 0, %s117
      %s134 = sphi 0, %s118
      %s138 = sphi 0, %s138
      %s140 = sphi 0, %s138
      %s141 = sphi 0, %s140
      %s155 = sphi 0, %s141
      %s159 = sphi 0, %s159
      %s161 = sphi 0, %s159
      %s162 = sphi 0, %s161
      %s176 = sphi 0, %s162
      %s180 = sphi 0, %s180
      %s182 = sphi 0, %s180
      %s183 = sphi 0, %s182
      %s197 = sphi 0, %s183
      %s201 = sphi 0, %s201
      %s203 = sphi 0, %s201
      %s204 = sphi 0, %s203
      %s218 = sphi 0, %s204
      %s224 = sphi 0, %s226
      %s227 = sphi 0, %s224
      %s228 = sphi 0, %s227
      %s244 = sphi 0, %s228
    $region4: #{tpu_custom_call.1} parent=1 // loop_header_branch
      %29 = sbr.rel (%p27) target = $region8
    $region5: #{tpu_custom_call.1} parent=1 // loop_body
      %s31 = ssub.s32 %s26, 1
      %s32 = ssub.s32 %s26, 2
      %s33 = sadd.s32 %s26, 1
      %s34 = ssub.s32 %s26, %s33
      %p35 = scmp.eq.s32.totalorder %s34, 0
      %s37 = sadd.s32 %s36, 1
      %s38 = scalar_select %p35, %s36, %s37
      %p41 = pneg %p35
      %p42 = scmp.eq.s32.totalorder %s26, 1
      %p43 = por %p41, %p42
      %p44 = scmp.ne.s32.totalorder %s36, %s39
      %p45 = scmp.eq.s32.totalorder %s26, 0
      %p46 = por %p44, %p45
      %p47 = scmp.ne.s32.totalorder %s36, %s39
      %p48 = scmp.eq.s32.totalorder %s31, 1
      %p49 = por %p47, %p48
      %p50 = scmp.ne.s32.totalorder %s39, %s40
      %p51 = scmp.eq.s32.totalorder %s31, 0
      %p52 = por %p50, %p51
      %p53 = scmp.ne.s32.totalorder %s39, %s40
      %p54 = scmp.eq.s32.totalorder %s32, 1
      %p55 = por %p53, %p54
      %p57 = scmp.ne.s32.totalorder %s40, %s56
      %p58 = scmp.eq.s32.totalorder %s32, 0
      %p59 = por %p57, %p58
      %s60 = ssub.s32 %s26, %s33
      %p61 = scmp.eq.s32.totalorder %s60, 0
      %s63 = sadd.s32 %s62, 1
      %s64 = scalar_select %p61, %s62, %s63
      %p67 = pneg %p61
      %p68 = scmp.eq.s32.totalorder %s26, 1
      %p69 = por %p67, %p68
      %p70 = scmp.ne.s32.totalorder %s62, %s65
      %p71 = scmp.eq.s32.totalorder %s26, 0
      %p72 = por %p70, %p71
      %p73 = scmp.ne.s32.totalorder %s62, %s65
      %p74 = scmp.eq.s32.totalorder %s31, 1
      %p75 = por %p73, %p74
      %p76 = scmp.ne.s32.totalorder %s65, %s66
      %p77 = scmp.eq.s32.totalorder %s31, 0
      %p78 = por %p76, %p77
      %p79 = scmp.ne.s32.totalorder %s65, %s66
      %p80 = scmp.eq.s32.totalorder %s32, 1
      %p81 = por %p79, %p80
      %p83 = scmp.ne.s32.totalorder %s66, %s82
      %p84 = scmp.eq.s32.totalorder %s32, 0
      %p85 = por %p83, %p84
      %s86 = ssub.s32 %s26, %s33
      %p87 = scmp.eq.s32.totalorder %s86, 0
      %s89 = sadd.s32 %s88, 1
      %s90 = scalar_select %p87, %s88, %s89
      %p93 = pneg %p87
      %p94 = scmp.eq.s32.totalorder %s26, 1
      %p95 = por %p93, %p94
      %p96 = scmp.ne.s32.totalorder %s88, %s91
      %p97 = scmp.eq.s32.totalorder %s26, 0
      %p98 = por %p96, %p97
      %p99 = scmp.ne.s32.totalorder %s88, %s91
      %p100 = scmp.eq.s32.totalorder %s31, 1
      %p101 = por %p99, %p100
      %p102 = scmp.ne.s32.totalorder %s91, %s92
      %p103 = scmp.eq.s32.totalorder %s31, 0
      %p104 = por %p102, %p103
      %p105 = scmp.ne.s32.totalorder %s91, %s92
      %p106 = scmp.eq.s32.totalorder %s32, 1
      %p107 = por %p105, %p106
      %p109 = scmp.ne.s32.totalorder %s92, %s108
      %p110 = scmp.eq.s32.totalorder %s32, 0
      %p111 = por %p109, %p110
      %s112 = ssub.s32 %s26, %s33
      %p113 = scmp.eq.s32.totalorder %s112, 0
      %s115 = sadd.s32 %s114, 1
      %s116 = scalar_select %p113, %s114, %s115
      %p119 = pneg %p113
      %p120 = scmp.eq.s32.totalorder %s26, 1
      %p121 = por %p119, %p120
      %p122 = scmp.ne.s32.totalorder %s114, %s117
      %p123 = scmp.eq.s32.totalorder %s26, 0
      %p124 = por %p122, %p123
      %p125 = scmp.ne.s32.totalorder %s114, %s117
      %p126 = scmp.eq.s32.totalorder %s31, 1
      %p127 = por %p125, %p126
      %p128 = scmp.ne.s32.totalorder %s117, %s118
      %p129 = scmp.eq.s32.totalorder %s31, 0
      %p130 = por %p128, %p129
      %p131 = scmp.ne.s32.totalorder %s117, %s118
      %p132 = scmp.eq.s32.totalorder %s32, 1
      %p133 = por %p131, %p132
      %p135 = scmp.ne.s32.totalorder %s118, %s134
      %p136 = scmp.eq.s32.totalorder %s32, 0
      %p137 = por %p135, %p136
      %s139 = sadd.s32 %s138, 1
      %p142 = scmp.eq.s32.totalorder %s26, 1
      %p143 = scmp.ne.s32.totalorder %s138, %s140
      %p144 = scmp.eq.s32.totalorder %s26, 0
      %p145 = por %p143, %p144
      %p146 = scmp.ne.s32.totalorder %s138, %s140
      %p147 = scmp.eq.s32.totalorder %s31, 1
      %p148 = por %p146, %p147
      %p149 = scmp.ne.s32.totalorder %s140, %s141
      %p150 = scmp.eq.s32.totalorder %s31, 0
      %p151 = por %p149, %p150
      %p152 = scmp.ne.s32.totalorder %s140, %s141
      %p153 = scmp.eq.s32.totalorder %s32, 1
      %p154 = por %p152, %p153
      %p156 = scmp.ne.s32.totalorder %s141, %s155
      %p157 = scmp.eq.s32.totalorder %s32, 0
      %p158 = por %p156, %p157
      %s160 = sadd.s32 %s159, 1
      %p163 = scmp.eq.s32.totalorder %s26, 1
      %p164 = scmp.ne.s32.totalorder %s159, %s161
      %p165 = scmp.eq.s32.totalorder %s26, 0
      %p166 = por %p164, %p165
      %p167 = scmp.ne.s32.totalorder %s159, %s161
      %p168 = scmp.eq.s32.totalorder %s31, 1
      %p169 = por %p167, %p168
      %p170 = scmp.ne.s32.totalorder %s161, %s162
      %p171 = scmp.eq.s32.totalorder %s31, 0
      %p172 = por %p170, %p171
      %p173 = scmp.ne.s32.totalorder %s161, %s162
      %p174 = scmp.eq.s32.totalorder %s32, 1
      %p175 = por %p173, %p174
      %p177 = scmp.ne.s32.totalorder %s162, %s176
      %p178 = scmp.eq.s32.totalorder %s32, 0
      %p179 = por %p177, %p178
      %s181 = sadd.s32 %s180, 1
      %p184 = scmp.eq.s32.totalorder %s26, 1
      %p185 = scmp.ne.s32.totalorder %s180, %s182
      %p186 = scmp.eq.s32.totalorder %s26, 0
      %p187 = por %p185, %p186
      %p188 = scmp.ne.s32.totalorder %s180, %s182
      %p189 = scmp.eq.s32.totalorder %s31, 1
      %p190 = por %p188, %p189
      %p191 = scmp.ne.s32.totalorder %s182, %s183
      %p192 = scmp.eq.s32.totalorder %s31, 0
      %p193 = por %p191, %p192
      %p194 = scmp.ne.s32.totalorder %s182, %s183
      %p195 = scmp.eq.s32.totalorder %s32, 1
      %p196 = por %p194, %p195
      %p198 = scmp.ne.s32.totalorder %s183, %s197
      %p199 = scmp.eq.s32.totalorder %s32, 0
      %p200 = por %p198, %p199
      %s202 = sadd.s32 %s201, 1
      %p205 = scmp.eq.s32.totalorder %s26, 1
      %p206 = scmp.ne.s32.totalorder %s201, %s203
      %p207 = scmp.eq.s32.totalorder %s26, 0
      %p208 = por %p206, %p207
      %p209 = scmp.ne.s32.totalorder %s201, %s203
      %p210 = scmp.eq.s32.totalorder %s31, 1
      %p211 = por %p209, %p210
      %p212 = scmp.ne.s32.totalorder %s203, %s204
      %p213 = scmp.eq.s32.totalorder %s31, 0
      %p214 = por %p212, %p213
      %p215 = scmp.ne.s32.totalorder %s203, %s204
      %p216 = scmp.eq.s32.totalorder %s32, 1
      %p217 = por %p215, %p216
      %p219 = scmp.ne.s32.totalorder %s204, %s218
      %p220 = scmp.eq.s32.totalorder %s32, 0
      %p221 = por %p219, %p220
      %s222 = ssub.s32 %s26, %s33
      %p223 = scmp.eq.s32.totalorder %s222, 0
      %s225 = sadd.s32 %s224, 1
      %s226 = scalar_select %p223, %s224, %s225
      %p229 = pneg %p223
      %p230 = scmp.eq.s32.totalorder %s26, 1
      %p231 = por %p229, %p230
      %p232 = scmp.ne.s32.totalorder %s224, %s227
      %p233 = scmp.eq.s32.totalorder %s26, 0
      %p234 = por %p232, %p233
      %p235 = scmp.ne.s32.totalorder %s224, %s227
      %p236 = scmp.eq.s32.totalorder %s31, 1
      %p237 = por %p235, %p236
      %p238 = scmp.ne.s32.totalorder %s227, %s228
      %p239 = scmp.eq.s32.totalorder %s31, 0
      %p240 = por %p238, %p239
      %p241 = scmp.ne.s32.totalorder %s227, %s228
      %p242 = scmp.eq.s32.totalorder %s32, 1
      %p243 = por %p241, %p242
      %p245 = scmp.ne.s32.totalorder %s228, %s244
      %p246 = scmp.eq.s32.totalorder %s32, 0
      %p247 = por %p245, %p246
      %p248 = scmp.le.s32.totalorder 1, %s26
      %p249 = scmp.lt.s32.totalorder %s26, 3
      %p250 = pnand %p248, %p249
      %p251 = pneg %p250
      // Predicated region
      $region9: #{tpu_custom_call.1} parent=5 // pred_check
        _
      $region10: #{tpu_custom_call.1} parent=5 // pred_check_branch
        %253 = sbr.rel (%p250) target = $region12
      $region11: #{tpu_custom_call.1} parent=5 // pred_region
        %s254 = ssub.s32 %s26, 1
        // Predicated region
        $region13: #{tpu_custom_call.1} parent=11 // pred_check
          %p255 = pneg %p151
        $region14: #{tpu_custom_call.1} parent=11 // pred_check_branch
          %257 = sbr.rel (%p255) target = $region16
        $region15: #{tpu_custom_call.1} parent=11 // pred_region
          %s259 = ssub.s32 128, 128
          %260 = vsyncadd [#allocation9], %s259
          %s262 = sshll.u32 [#allocation10], 4
          %s263 = int_to_ptr.vmem [resolvable:$true] %s262
          %265 = dma.hbm_to_vmem [thread:$0]  %s4, 128, %s263, [#allocation9]
        $region16: #{tpu_custom_call.1} parent=11 // pred_fallthru
          _
        // Predicated region
        $region17: #{tpu_custom_call.1} parent=11 // pred_check
          %p266 = pneg %p172
        $region18: #{tpu_custom_call.1} parent=11 // pred_check_branch
          %268 = sbr.rel (%p266) target = $region20
        $region19: #{tpu_custom_call.1} parent=11 // pred_region
          _
        $region20: #{tpu_custom_call.1} parent=11 // pred_fallthru
          _
        // Predicated region
        $region21: #{tpu_custom_call.1} parent=11 // pred_check
          %p269 = pneg %p193
        $region22: #{tpu_custom_call.1} parent=11 // pred_check_branch
          %271 = sbr.rel (%p269) target = $region24
        $region23: #{tpu_custom_call.1} parent=11 // pred_region
          _
        $region24: #{tpu_custom_call.1} parent=11 // pred_fallthru
          _
        // Predicated region
        $region25: #{tpu_custom_call.1} parent=11 // pred_check
          %p272 = pneg %p214
        $region26: #{tpu_custom_call.1} parent=11 // pred_check_branch
          %274 = sbr.rel (%p272) target = $region28
        $region27: #{tpu_custom_call.1} parent=11 // pred_region
          _
        $region28: #{tpu_custom_call.1} parent=11 // pred_fallthru
          _
      $region12: #{tpu_custom_call.1} parent=5 // pred_fallthru
        _
      %p275 = scmp.lt.s32.totalorder %s26, 2
      // Predicated region
      $region29: #{tpu_custom_call.1} parent=5 // pred_check
        %p276 = pneg %p275
      $region30: #{tpu_custom_call.1} parent=5 // pred_check_branch
        %278 = sbr.rel (%p276) target = $region32
      $region31: #{tpu_custom_call.1} parent=5 // pred_region
        // Predicated region
        $region33: #{tpu_custom_call.1} parent=31 // pred_check
          %p279 = pneg %p46
        $region34: #{tpu_custom_call.1} parent=31 // pred_check_branch
          %281 = sbr.rel (%p279) target = $region36
        $region35: #{tpu_custom_call.1} parent=31 // pred_region
          %s282 = sand.u32 %s36, 1
          %s283 = scalar_lea.sflag [#allocation3], %s282
          %s284 = sand.u32 %s36, 1
          %s285 = smul.addr %s284, 4
          %s286 = scalar_lea.vmem [#allocation2], %s285
          %s288 = ssub.s32 64, 64
          %289 = vsyncadd %s283, %s288
          %s290 = smul.addr %s26, 64
          %s291 = scalar_lea.hbm %s0, %s290
          %s293 = sshll.u32 %s286, 4
          %s294 = int_to_ptr.vmem [resolvable:$true] %s293
          %296 = dma.hbm_to_vmem [thread:$0]  %s291, 64, %s294, %s283
        $region36: #{tpu_custom_call.1} parent=31 // pred_fallthru
          _
        // Predicated region
        $region37: #{tpu_custom_call.1} parent=31 // pred_check
          %p297 = pneg %p72
        $region38: #{tpu_custom_call.1} parent=31 // pred_check_branch
          %299 = sbr.rel (%p297) target = $region40
        $region39: #{tpu_custom_call.1} parent=31 // pred_region
          %s300 = sand.u32 %s26, 1
          %s301 = scalar_lea.sflag [#allocation6], %s300
          %s302 = sand.u32 %s62, 1
          %s303 = smul.addr %s302, 4
          %s304 = scalar_lea.vmem [#allocation5], %s303
          %s306 = ssub.s32 64, 64
          %307 = vsyncadd %s301, %s306
          %s308 = smul.addr %s26, 64
          %s309 = scalar_lea.hbm %s1, %s308
          %s311 = sshll.u32 %s304, 4
          %s312 = int_to_ptr.vmem [resolvable:$true] %s311
          %314 = dma.hbm_to_vmem [thread:$0]  %s309, 64, %s312, %s301
        $region40: #{tpu_custom_call.1} parent=31 // pred_fallthru
          _
        // Predicated region
        $region41: #{tpu_custom_call.1} parent=31 // pred_check
          %p315 = pneg %p98
        $region42: #{tpu_custom_call.1} parent=31 // pred_check_branch
          %317 = sbr.rel (%p315) target = $region44
        $region43: #{tpu_custom_call.1} parent=31 // pred_region
          %s318 = sand.u32 %s26, 1
          %s319 = scalar_lea.sflag [#allocation6], %s318
          %s320 = sand.u32 %s88, 1
          %s321 = smul.addr %s320, 4
          %s322 = scalar_lea.vmem [#allocation7], %s321
          %s324 = ssub.s32 64, 64
          %325 = vsyncadd %s319, %s324
          %s326 = smul.addr %s26, 64
          %s327 = scalar_lea.hbm %s2, %s326
          %s329 = sshll.u32 %s322, 4
          %s330 = int_to_ptr.vmem [resolvable:$true] %s329
          %332 = dma.hbm_to_vmem [thread:$0]  %s327, 64, %s330, %s319
        $region44: #{tpu_custom_call.1} parent=31 // pred_fallthru
          _
        // Predicated region
        $region45: #{tpu_custom_call.1} parent=31 // pred_check
          %p333 = pneg %p124
        $region46: #{tpu_custom_call.1} parent=31 // pred_check_branch
          %335 = sbr.rel (%p333) target = $region48
        $region47: #{tpu_custom_call.1} parent=31 // pred_region
          %s336 = sand.u32 %s26, 1
          %s337 = scalar_lea.sflag [#allocation9], %s336
          %s338 = sand.u32 %s114, 1
          %s339 = smul.addr %s338, 4
          %s340 = scalar_lea.vmem [#allocation8], %s339
          %s342 = ssub.s32 64, 64
          %343 = vsyncadd %s337, %s342
          %s344 = smul.addr %s26, 64
          %s345 = scalar_lea.hbm %s3, %s344
          %s347 = sshll.u32 %s340, 4
          %s348 = int_to_ptr.vmem [resolvable:$true] %s347
          %350 = dma.hbm_to_vmem [thread:$0]  %s345, 64, %s348, %s337
        $region48: #{tpu_custom_call.1} parent=31 // pred_fallthru
          _
      $region32: #{tpu_custom_call.1} parent=5 // pred_fallthru
        _
      %p351 = scmp.le.s32.totalorder 1, %s26
      %p352 = scmp.lt.s32.totalorder %s26, 3
      %p353 = pnand %p351, %p352
      %p354 = pneg %p353
      // Predicated region
      $region49: #{tpu_custom_call.1} parent=5 // pred_check
        _
      $region50: #{tpu_custom_call.1} parent=5 // pred_check_branch
        %356 = sbr.rel (%p353) target = $region52
      $region51: #{tpu_custom_call.1} parent=5 // pred_region
        %s357 = ssub.s32 %s26, 1
        %s358 = sand.u32 %s39, 1
        %s359 = scalar_lea.sflag [#allocation3], %s358
        %s360 = sand.u32 %s39, 1
        %s361 = smul.addr %s360, 4
        %s362 = scalar_lea.vmem [#allocation2], %s361
        // Predicated region
        $region53: #{tpu_custom_call.1} parent=51 // pred_check
          %p363 = pneg %p52
        $region54: #{tpu_custom_call.1} parent=51 // pred_check_branch
          %365 = sbr.rel (%p363) target = $region56
        $region55: #{tpu_custom_call.1} parent=51 // pred_region
          %366 = dma.done %s359, 64
        $region56: #{tpu_custom_call.1} parent=51 // pred_fallthru
          _
        %s367 = sand.u32 %s31, 1
        %s368 = scalar_lea.sflag [#allocation6], %s367
        %s369 = sand.u32 %s65, 1
        %s370 = smul.addr %s369, 4
        %s371 = scalar_lea.vmem [#allocation5], %s370
        // Predicated region
        $region57: #{tpu_custom_call.1} parent=51 // pred_check
          %p372 = pneg %p78
        $region58: #{tpu_custom_call.1} parent=51 // pred_check_branch
          %374 = sbr.rel (%p372) target = $region60
        $region59: #{tpu_custom_call.1} parent=51 // pred_region
          %375 = dma.done %s368, 64
        $region60: #{tpu_custom_call.1} parent=51 // pred_fallthru
          _
        %s376 = sand.u32 %s31, 1
        %s377 = scalar_lea.sflag [#allocation6], %s376
        %s378 = sand.u32 %s91, 1
        %s379 = smul.addr %s378, 4
        %s380 = scalar_lea.vmem [#allocation7], %s379
        // Predicated region
        $region61: #{tpu_custom_call.1} parent=51 // pred_check
          %p381 = pneg %p104
        $region62: #{tpu_custom_call.1} parent=51 // pred_check_branch
          %383 = sbr.rel (%p381) target = $region64
        $region63: #{tpu_custom_call.1} parent=51 // pred_region
          %384 = dma.done %s377, 64
        $region64: #{tpu_custom_call.1} parent=51 // pred_fallthru
          _
        %s385 = sand.u32 %s31, 1
        %s386 = scalar_lea.sflag [#allocation9], %s385
        %s387 = sand.u32 %s117, 1
        %s388 = smul.addr %s387, 4
        %s389 = scalar_lea.vmem [#allocation8], %s388
        // Predicated region
        $region65: #{tpu_custom_call.1} parent=51 // pred_check
          %p390 = pneg %p130
        $region66: #{tpu_custom_call.1} parent=51 // pred_check_branch
          %392 = sbr.rel (%p390) target = $region68
        $region67: #{tpu_custom_call.1} parent=51 // pred_region
          %393 = dma.done %s386, 64
        $region68: #{tpu_custom_call.1} parent=51 // pred_fallthru
          _
        // Predicated region
        $region69: #{tpu_custom_call.1} parent=51 // pred_check
          %p394 = pneg %p151
        $region70: #{tpu_custom_call.1} parent=51 // pred_check_branch
          %396 = sbr.rel (%p394) target = $region72
        $region71: #{tpu_custom_call.1} parent=51 // pred_region
          %397 = dma.done [#allocation9], 128
        $region72: #{tpu_custom_call.1} parent=51 // pred_fallthru
          _
        %s398 = sand.u32 %s39, 1
        %s399 = scalar_lea.sflag [#allocation3], %s398
        %s400 = sand.u32 %s39, 1
        %s401 = smul.addr %s400, 4
        %s402 = scalar_lea.vmem [#allocation2], %s401
        %p403 = pneg %p52
        %p404 = pneg %p49
        %s405 = sand.u32 %s31, 1
        %s406 = scalar_lea.sflag [#allocation6], %s405
        %s407 = sand.u32 %s65, 1
        %s408 = smul.addr %s407, 4
        %s409 = scalar_lea.vmem [#allocation5], %s408
        %p410 = pneg %p78
        %p411 = pneg %p75
        %s412 = sand.u32 %s31, 1
        %s413 = scalar_lea.sflag [#allocation6], %s412
        %s414 = sand.u32 %s91, 1
        %s415 = smul.addr %s414, 4
        %s416 = scalar_lea.vmem [#allocation7], %s415
        %p417 = pneg %p104
        %p418 = pneg %p101
        %s419 = sand.u32 %s31, 1
        %s420 = scalar_lea.sflag [#allocation9], %s419
        %s421 = sand.u32 %s117, 1
        %s422 = smul.addr %s421, 4
        %s423 = scalar_lea.vmem [#allocation8], %s422
        %p424 = pneg %p130
        %p425 = pneg %p127
        %p426 = pneg %p151
        %p427 = pneg %p148
        %p428 = pneg %p172
        %p429 = pneg %p169
        %p430 = pneg %p193
        %p431 = pneg %p190
        %p432 = pneg %p214
        %p433 = pneg %p211
        %p434 = pneg %p240
        %p435 = pneg %p237
        %s436 = sand.u32 %s227, 1
        %s437 = scalar_lea.sflag [#allocation4], %s436
        %s438 = sand.u32 %s227, 1
        %s439 = smul.addr %s438, 4
        %s440 = scalar_lea.vmem [#allocation11], %s439
        %v441 = vlaneseq
        %v442 = vshrl.u32 %v441, 7
        %v443 = vlaneseq
        %v444 = vand.u32 %v443, 127
        %vm445 = vcmp.ne.s32.totalorder %v442, %v444
        %v446 = vld [vmem:[%s362] sm:$0xf]
        %v447 = vsel %vm445, %v446, 0.0
        %v448 = vld [vmem:[%s371] sm:$0xf]
        %v449 = vld [vmem:[#allocation10] sm:$0xff]
        %vm450 = vcmask 64512
        %v452 = vsel %vm450, %v448, 0
        %454 = vmatprep.subr.mxu0 0.0
        %455 = vmatpush1.msra.mxu0 0.0
        %456 = vmatprep.subr.mxu0 0.0
        %457 = vmatpush1.msra.mxu0 0.0
        %458 = vmatprep.subr.mxu0 0.0
        %459 = vmatpush1.msra.mxu0 0.0
        %460 = vmatprep.subr.mxu0 0.0
        %461 = vmatpush1.msra.mxu0 0.0
        %462 = vmatprep.subr.mxu0 0.0
        %463 = vmatpush1.msra.mxu0 0.0
        %464 = vmatprep.subr.mxu0 0.0
        %465 = vmatpush1.msra.mxu0 0.0
        %466 = vmatprep.subr.mxu0 0.0
        %467 = vmatpush1.msra.mxu0 0.0
        %468 = vmatprep.subr.mxu0 0.0
        %469 = vmatpush1.msra.mxu0 0.0
        %470 = vmatprep.subr.mxu0 0.0
        %471 = vmatpush1.msra.mxu0 0.0
        %472 = vmatprep.subr.mxu0 0.0
        %473 = vmatpush1.msra.mxu0 0.0
        %474 = vmatprep.subr.mxu0 0.0
        %475 = vmatpush1.msra.mxu0 0.0
        %476 = vmatprep.subr.mxu0 0.0
        %477 = vmatpush1.msra.mxu0 0.0
        %478 = vmatprep.subr.mxu0 0.0
        %479 = vmatpush1.msra.mxu0 0.0
        %480 = vmatprep.subr.mxu0 0.0
        %481 = vmatpush1.msra.mxu0 0.0
        %482 = vmatprep.subr.mxu0 0.0
        %483 = vmatpush1.msra.mxu0 0.0
        %484 = vmatprep.subr.mxu0 0.0
        %485 = vmatpush1.msra.mxu0 %v449
        %486 = vmatprep.subr.mxu0 0.0
        %487 = vmatpush2.msra.mxu0 0.0
        %488 = vmatprep.subr.mxu0 0.0
        %489 = vmatpush2.msra.mxu0 0.0
        %490 = vmatprep.subr.mxu0 0.0
        %491 = vmatpush2.msra.mxu0 0.0
        %492 = vmatprep.subr.mxu0 0.0
        %493 = vmatpush2.msra.mxu0 0.0
        %494 = vmatprep.subr.mxu0 0.0
        %495 = vmatpush2.msra.mxu0 0.0
        %496 = vmatprep.subr.mxu0 0.0
        %497 = vmatpush2.msra.mxu0 0.0
        %498 = vmatprep.subr.mxu0 0.0
        %499 = vmatpush2.msra.mxu0 0.0
        %500 = vmatprep.subr.mxu0 0.0
        %501 = vmatpush2.msra.mxu0 0.0
        %502 = vmatprep.subr.mxu0 0.0
        %503 = vmatpush2.msra.mxu0 0.0
        %504 = vmatprep.subr.mxu0 0.0
        %505 = vmatpush2.msra.mxu0 0.0
        %506 = vmatprep.subr.mxu0 0.0
        %507 = vmatpush2.msra.mxu0 0.0
        %508 = vmatprep.subr.mxu0 0.0
        %509 = vmatpush2.msra.mxu0 0.0
        %510 = vmatprep.subr.mxu0 0.0
        %511 = vmatpush2.msra.mxu0 0.0
        %512 = vmatprep.subr.mxu0 0.0
        %513 = vmatpush2.msra.mxu0 0.0
        %514 = vmatprep.subr.mxu0 0.0
        %515 = vmatpush2.msra.mxu0 0.0
        %516 = vmatprep.subr.mxu0 0.0
        %517 = vmatpush2.msra.mxu0 0.0
        %518 = vmatprep.mubr.f32.mxu0 0.0
        %519 = vmatmul.mubr.f32.gmra.mxu0 %v452
        %v520 = vpop.f32.mrf.mxu0
        %v521 = vadd.f32 0.0, %v520
        %v522 = vpop.f32.mrf.mxu0
        %523 = vdwg.mxu0
        %v524 = vld [vmem:[%s5] sm:$0xff]
        %525 = vmatprep.subr.mxu0 0.0
        %526 = vmatpush1.msra.mxu0 0.0
        %527 = vmatprep.subr.mxu0 0.0
        %528 = vmatpush1.msra.mxu0 0.0
        %529 = vmatprep.subr.mxu0 0.0
        %530 = vmatpush1.msra.mxu0 0.0
        %531 = vmatprep.subr.mxu0 0.0
        %532 = vmatpush1.msra.mxu0 0.0
        %533 = vmatprep.subr.mxu0 0.0
        %534 = vmatpush1.msra.mxu0 0.0
        %535 = vmatprep.subr.mxu0 0.0
        %536 = vmatpush1.msra.mxu0 0.0
        %537 = vmatprep.subr.mxu0 0.0
        %538 = vmatpush1.msra.mxu0 0.0
        %539 = vmatprep.subr.mxu0 0.0
        %540 = vmatpush1.msra.mxu0 0.0
        %541 = vmatprep.subr.mxu0 0.0
        %542 = vmatpush1.msra.mxu0 0.0
        %543 = vmatprep.subr.mxu0 0.0
        %544 = vmatpush1.msra.mxu0 0.0
        %545 = vmatprep.subr.mxu0 0.0
        %546 = vmatpush1.msra.mxu0 0.0
        %547 = vmatprep.subr.mxu0 0.0
        %548 = vmatpush1.msra.mxu0 0.0
        %549 = vmatprep.subr.mxu0 0.0
        %550 = vmatpush1.msra.mxu0 0.0
        %551 = vmatprep.subr.mxu0 0.0
        %552 = vmatpush1.msra.mxu0 0.0
        %553 = vmatprep.subr.mxu0 0.0
        %554 = vmatpush1.msra.mxu0 0.0
        %555 = vmatprep.subr.mxu0 0.0
        %556 = vmatpush1.msra.mxu0 %v524
        %557 = vmatprep.subr.mxu0 0.0
        %558 = vmatpush2.msra.mxu0 0.0
        %559 = vmatprep.subr.mxu0 0.0
        %560 = vmatpush2.msra.mxu0 0.0
        %561 = vmatprep.subr.mxu0 0.0
        %562 = vmatpush2.msra.mxu0 0.0
        %563 = vmatprep.subr.mxu0 0.0
        %564 = vmatpush2.msra.mxu0 0.0
        %565 = vmatprep.subr.mxu0 0.0
        %566 = vmatpush2.msra.mxu0 0.0
        %567 = vmatprep.subr.mxu0 0.0
        %568 = vmatpush2.msra.mxu0 0.0
        %569 = vmatprep.subr.mxu0 0.0
        %570 = vmatpush2.msra.mxu0 0.0
        %571 = vmatprep.subr.mxu0 0.0
        %572 = vmatpush2.msra.mxu0 0.0
        %573 = vmatprep.subr.mxu0 0.0
        %574 = vmatpush2.msra.mxu0 0.0
        %575 = vmatprep.subr.mxu0 0.0
        %576 = vmatpush2.msra.mxu0 0.0
        %577 = vmatprep.subr.mxu0 0.0
        %578 = vmatpush2.msra.mxu0 0.0
        %579 = vmatprep.subr.mxu0 0.0
        %580 = vmatpush2.msra.mxu0 0.0
        %581 = vmatprep.subr.mxu0 0.0
        %582 = vmatpush2.msra.mxu0 0.0
        %583 = vmatprep.subr.mxu0 0.0
        %584 = vmatpush2.msra.mxu0 0.0
        %585 = vmatprep.subr.mxu0 0.0
        %586 = vmatpush2.msra.mxu0 0.0
        %587 = vmatprep.subr.mxu0 0.0
        %588 = vmatpush2.msra.mxu0 0.0
        %589 = vmatprep.mubr.f32.mxu0 0.0
        %590 = vmatmul.mubr.f32.gmra.mxu0 %v452
        %v591 = vpop.f32.mrf.mxu0
        %v592 = vadd.f32 0.0, %v591
        %v593 = vpop.f32.mrf.mxu0
        %594 = vdwg.mxu0
        %vm595 = vcmask 31744
        %v597 = vsel %vm595, %v447, 0
        %vm599 = vcmask 1043456
        %v601 = vsel %vm599, %v592, 0
        %603 = vmatprep.subr.mxu0 0.0
        %604 = vmatpush1.msra.mxu0 0.0
        %605 = vmatprep.subr.mxu0 0.0
        %606 = vmatpush1.msra.mxu0 0.0
        %607 = vmatprep.subr.mxu0 0.0
        %608 = vmatpush1.msra.mxu0 0.0
        %609 = vmatprep.subr.mxu0 0.0
        %610 = vmatpush1.msra.mxu0 0.0
        %611 = vmatprep.subr.mxu0 0.0
        %612 = vmatpush1.msra.mxu0 0.0
        %613 = vmatprep.subr.mxu0 0.0
        %614 = vmatpush1.msra.mxu0 0.0
        %615 = vmatprep.subr.mxu0 0.0
        %616 = vmatpush1.msra.mxu0 0.0
        %617 = vmatprep.subr.mxu0 0.0
        %618 = vmatpush1.msra.mxu0 0.0
        %619 = vmatprep.subr.mxu0 0.0
        %620 = vmatpush1.msra.mxu0 0.0
        %621 = vmatprep.subr.mxu0 0.0
        %622 = vmatpush1.msra.mxu0 0.0
        %623 = vmatprep.subr.mxu0 0.0
        %624 = vmatpush1.msra.mxu0 0.0
        %625 = vmatprep.subr.mxu0 0.0
        %626 = vmatpush1.msra.mxu0 0.0
        %627 = vmatprep.subr.mxu0 0.0
        %628 = vmatpush1.msra.mxu0 0.0
        %629 = vmatprep.subr.mxu0 0.0
        %630 = vmatpush1.msra.mxu0 0.0
        %631 = vmatprep.subr.mxu0 0.0
        %632 = vmatpush1.msra.mxu0 0.0
        %633 = vmatprep.subr.mxu0 0.0
        %634 = vmatpush1.msra.mxu0 %v601
        %635 = vmatprep.subr.mxu0 0.0
        %636 = vmatpush2.msra.mxu0 0.0
        %637 = vmatprep.subr.mxu0 0.0
        %638 = vmatpush2.msra.mxu0 0.0
        %639 = vmatprep.subr.mxu0 0.0
        %640 = vmatpush2.msra.mxu0 0.0
        %641 = vmatprep.subr.mxu0 0.0
        %642 = vmatpush2.msra.mxu0 0.0
        %643 = vmatprep.subr.mxu0 0.0
        %644 = vmatpush2.msra.mxu0 0.0
        %645 = vmatprep.subr.mxu0 0.0
        %646 = vmatpush2.msra.mxu0 0.0
        %647 = vmatprep.subr.mxu0 0.0
        %648 = vmatpush2.msra.mxu0 0.0
        %649 = vmatprep.subr.mxu0 0.0
        %650 = vmatpush2.msra.mxu0 0.0
        %651 = vmatprep.subr.mxu0 0.0
        %652 = vmatpush2.msra.mxu0 0.0
        %653 = vmatprep.subr.mxu0 0.0
        %654 = vmatpush2.msra.mxu0 0.0
        %655 = vmatprep.subr.mxu0 0.0
        %656 = vmatpush2.msra.mxu0 0.0
        %657 = vmatprep.subr.mxu0 0.0
        %658 = vmatpush2.msra.mxu0 0.0
        %659 = vmatprep.subr.mxu0 0.0
        %660 = vmatpush2.msra.mxu0 0.0
        %661 = vmatprep.subr.mxu0 0.0
        %662 = vmatpush2.msra.mxu0 0.0
        %663 = vmatprep.subr.mxu0 0.0
        %664 = vmatpush2.msra.mxu0 0.0
        %665 = vmatprep.subr.mxu0 0.0
        %666 = vmatpush2.msra.mxu0 0.0
        %667 = vmatprep.mubr.f32.mxu0 0.0
        %668 = vmatmul.mubr.f32.gmra.mxu0 %v597
        %v669 = vpop.f32.mrf.mxu0
        %v670 = vadd.f32 0.0, %v669
        %v671 = vpop.f32.mrf.mxu0
        %672 = vdwg.mxu0
        %v673 = vld [vmem:[%s380] sm:$0xf]
        %v674 = vmul.f32 %v447, %v673
        %vm675 = vcmask 27648
        %v676 = vsel %vm675, %v674, 0.0
        %677 = vadd.xlane.f32.xlu0 %v676
        %v678 = vpop.xlane.xlu0 %677
        %v679 = vld [vmem:[%s389] sm:$0xf]
        %v680 = vmul.f32 %v447, %v679
        %v681 = vsel %vm675, %v680, 0.0
        %682 = vadd.xlane.f32.xlu0 %v681
        %v683 = vpop.xlane.xlu0 %682
        %v684 = vld [vmem:[%s6] sm:$0x3]
        %v685 = vlaneseq
        %v686 = vshrl.u32 %v685, 7
        %v687 = vsub.s32 0, %v686
        %v688 = vrot.slane %v684, %v687
        %v689 = vmul.f32 %v678, %v688
        %v690 = vlaneseq
        %v691 = vshrl.u32 %v690, 7
        %v692 = vsub.s32 1, %v691
        %v693 = vrot.slane %v684, %v692
        %v694 = vmul.f32 %v683, %v693
        %v695 = vadd.f32 %v689, %v694
        %v696 = vadd.f32 %v521, %v670
        %v697 = vadd.f32 %v696, %v695
        %v698 = vld [vmem:[%s7] sm:$0x1]
        %v700 = vlaneseq
        %v701 = vshrl.u32 %v700, 7
        %v702 = vsub.s32 0, %v701
        %v703 = vrot.slane %v698, %v702
        %v705 = vadd.f32 %v697, %v703
        %v706 = vmax.f32 %v705, 0.0
        %vm707 = vcmask 125952
        %708 = vst.msk [vmem:[%s440] sm:$0xf] %vm707, %v706
        %s709 = sand.u32 %s227, 1
        %s710 = scalar_lea.sflag [#allocation4], %s709
        %s711 = sand.u32 %s227, 1
        %s712 = smul.addr %s711, 4
        %s713 = scalar_lea.vmem [#allocation11], %s712
        // Predicated region
        $region73: #{tpu_custom_call.1} parent=51 // pred_check
          %p714 = pneg %p237
        $region74: #{tpu_custom_call.1} parent=51 // pred_check_branch
          %716 = sbr.rel (%p714) target = $region76
        $region75: #{tpu_custom_call.1} parent=51 // pred_region
          %s718 = ssub.s32 64, 64
          %719 = vsyncadd %s710, %s718
          %s720 = smul.addr %s31, 64
          %s721 = scalar_lea.hbm %s8, %s720
          %s723 = sshll.u32 %s713, 4
          %s724 = int_to_ptr.vmem [resolvable:$true] %s723
          %726 = dma.vmem_to_hbm [thread:$0]  %s724, 64, %s721, %s710
        $region76: #{tpu_custom_call.1} parent=51 // pred_fallthru
          _
      $region52: #{tpu_custom_call.1} parent=5 // pred_fallthru
        _
      %p727 = scmp.le.s32.totalorder 2, %s26
      // Predicated region
      $region77: #{tpu_custom_call.1} parent=5 // pred_check
        %p728 = pneg %p727
      $region78: #{tpu_custom_call.1} parent=5 // pred_check_branch
        %730 = sbr.rel (%p728) target = $region80
      $region79: #{tpu_custom_call.1} parent=5 // pred_region
        %s731 = ssub.s32 %s26, 2
        // Predicated region
        $region81: #{tpu_custom_call.1} parent=79 // pred_check
          %p732 = pneg %p243
        $region82: #{tpu_custom_call.1} parent=79 // pred_check_branch
          %734 = sbr.rel (%p732) target = $region84
        $region83: #{tpu_custom_call.1} parent=79 // pred_region
          %s735 = sand.u32 %s228, 1
          %s736 = scalar_lea.sflag [#allocation4], %s735
          %s737 = sand.u32 %s228, 1
          %s738 = smul.addr %s737, 4
          %s739 = scalar_lea.vmem [#allocation11], %s738
          %740 = dma.done %s736, 64
        $region84: #{tpu_custom_call.1} parent=79 // pred_fallthru
          _
      $region80: #{tpu_custom_call.1} parent=5 // pred_fallthru
        _
    $region6: #{tpu_custom_call.1} parent=1 // loop_footer
      %s30 = sadd.s32 1, %s26
    $region7: #{tpu_custom_call.1} parent=1 // loop_footer_branch
      %25 = sbr.rel target = $region3
    $region8: #{tpu_custom_call.1} parent=1 // loop_exit
      _
    %741 = vsyncpa [#allocation3], 1
    %s742 = scalar_lea.sflag [#allocation3], 1
    %743 = vsyncpa %s742, 1
    %744 = vsyncpa [#allocation6], 1
    %s745 = scalar_lea.sflag [#allocation6], 1
    %746 = vsyncpa %s745, 1
    %747 = vsyncpa [#allocation9], 1
    %s748 = scalar_lea.sflag [#allocation9], 1
    %749 = vsyncpa %s748, 1
    %750 = vsyncpa [#allocation4], 1
    %s751 = scalar_lea.sflag [#allocation4], 1
    %752 = vsyncpa %s751, 1

</llo_original>
